<compile_context>
chip_gen: v7x
topology: tpu7x:2x2x1
jax: 0.10.0
libtpu: 0.0.40
codegen_flags: <defaults>
</compile_context>

<pallas_src>
import functools
import math

import jax
import jax.numpy as jnp
import numpy as np
from jax.experimental import pallas as pl
from jax.experimental.pallas import tpu as pltpu


def _bn_local_kernel(x_ref, w_ref, b_ref, o_ref, *, eps: float, inv_n: float):
    # x_ref: (M, TC, L) slab — one virtual-batch group x one channel tile.
    x = x_ref[...]                                                    # storage dtype

    # One-pass statistics with f32 accumulation (no full f32 copy of the tile):
    #   mean = E[x],  var = E[x^2] - mean^2   (biased, matches unbiased=False)
    s1 = jnp.sum(x, axis=(0, 2), keepdims=True, dtype=jnp.float32)    # (1, TC, 1)
    s2 = jnp.sum(jnp.square(x.astype(jnp.float32)), axis=(0, 2), keepdims=True)
    mean = s1 * inv_n
    var = jnp.maximum(s2 * inv_n - jnp.square(mean), 0.0)             # guard cancellation
    inv_std = jax.lax.rsqrt(var + eps)                                # (1, TC, 1)

    # Fold the per-channel affine into the normalization: y = x*scale + shift.
    w = w_ref[...][None]                                              # (1, TC, 1) f32
    b = b_ref[...][None]                                              # (1, TC, 1) f32
    scale = w * inv_std
    shift = b - mean * scale
    y = x.astype(jnp.float32) * scale + shift                         # 1 FMA / element
    o_ref[...] = y.astype(o_ref.dtype)


def _pick_channel_tile(C, M, L, itemsize, sublane_mult, budget_bytes):
    """Largest channel tile TC that divides C, respects sublane packing, and keeps
    roughly (2x input + 2x output + f32 temps) under budget_bytes per grid step."""
    per_channel = M * L * itemsize
    max_tc = max(1, budget_bytes // (6 * per_channel))
    if C <= max_tc:
        return C
    if C % sublane_mult != 0:
        # Cannot tile the sublane axis cleanly; block == full dim is always a
        # valid layout — fall back and rely on vmem_limit_bytes.
        return C
    tc = (max_tc // sublane_mult) * sublane_mult
    while tc >= sublane_mult:
        if C % tc == 0:
            return tc
        tc -= sublane_mult
    return C


def batch_norm_local(x, weight, bias, *, virtual_bs: int = 8, eps: float = 1e-5):
    """Pallas TPU implementation of BatchNormLocal.forward.

    x: (B, C, L) float array (NCL). weight, bias: (C,) float arrays.
    """
    B, C, L = x.shape
    G = int(math.ceil(B / virtual_bs))
    # Mirrors torch's x.view(G, -1, C, L): B must split evenly into G groups.
    assert B % G == 0, "batch must split evenly into G virtual-batch groups (torch .view requirement)"
    M = B // G

    xg = x.reshape(G, M, C, L)
    # weight/bias stored channel-major (C, 1) so the channel tile lives on the
    # sublane axis (multiple-of-8 friendly for any TC).
    w2 = jnp.asarray(weight, jnp.float32).reshape(C, 1)
    b2 = jnp.asarray(bias, jnp.float32).reshape(C, 1)

    itemsize = jnp.dtype(x.dtype).itemsize
    sublane_mult = {4: 8, 2: 16, 1: 32}.get(itemsize, 8)
    tc = _pick_channel_tile(C, M, L, itemsize, sublane_mult,
                            budget_bytes=24 * 1024 * 1024)
    num_c_tiles = C // tc
    # TODO(synk): if even a single minimal channel tile (M, sublane_mult, L) does
    # not fit VMEM, an L-tiled two-pass (stats-accumulate then normalize) scheme
    # is required; not implemented here (it costs ~1.5x HBM traffic).

    tile_bytes = M * tc * L * itemsize
    vmem_limit = int(min(64 * 1024 * 1024,
                         max(32 * 1024 * 1024, 6 * tile_bytes + (2 << 20))))

    kernel = functools.partial(_bn_local_kernel, eps=float(eps),
                               inv_n=1.0 / float(M * L))

    out = pl.pallas_call(
        kernel,
        out_shape=jax.ShapeDtypeStruct((G, M, C, L), x.dtype),
        grid_spec=pltpu.PrefetchScalarGridSpec(
            num_scalar_prefetch=0,
            grid=(G, num_c_tiles),
            in_specs=[
                # one (group, channel-tile) slab per step; L kept full (lane-dense
                # when L % 128 == 0, and "full extent" is always layout-legal)
                pl.BlockSpec((None, M, tc, L), lambda g, c: (g, 0, c, 0)),
                pl.BlockSpec((tc, 1), lambda g, c: (c, 0)),   # weight tile (f32)
                pl.BlockSpec((tc, 1), lambda g, c: (c, 0)),   # bias tile   (f32)
            ],
            out_specs=pl.BlockSpec((None, M, tc, L), lambda g, c: (g, 0, c, 0)),
        ),
        compiler_params=pltpu.CompilerParams(
            dimension_semantics=("parallel", "parallel"),
            vmem_limit_bytes=vmem_limit,
        ),
    )(xg, w2, b2)

    return out.reshape(B, C, L)


def batch_norm_local_ref(x, weight, bias, *, virtual_bs: int = 8, eps: float = 1e-5):
    """Pure-JAX reference mirroring the PyTorch module exactly."""
    B, C, L = x.shape
    G = int(math.ceil(B / virtual_bs))
    xg = x.reshape(G, -1, C, L)
    mean = xg.mean(axis=(1, 3), keepdims=True)
    var = xg.var(axis=(1, 3), keepdims=True)  # biased (unbiased=False)
    y = (xg - mean) / jnp.sqrt(var + eps)
    y = y * weight[None, :, None] + bias[None, :, None]
    return y.reshape(B, C, L)


if __name__ == "__main__":
    key = jax.random.PRNGKey(0)
    B, C, L = 16, 8, 128          # B=16 with virtual_bs=8 -> G=2 groups of M=8
    virtual_bs = 8
    eps = 1e-5

    kx, = jax.random.split(key, 1)
    x = jax.random.normal(kx, (B, C, L), dtype=jnp.float32)

    # Deterministic parameters (module __init__: weight=ones, bias=zeros);
    # perturbed deterministically so the affine path is actually exercised.
    weight = jnp.ones((C,), dtype=jnp.float32) + 0.1 * jnp.arange(C, dtype=jnp.float32)
    bias = jnp.zeros((C,), dtype=jnp.float32) + 0.01 * jnp.arange(C, dtype=jnp.float32)

    out = batch_norm_local(x, weight, bias, virtual_bs=virtual_bs, eps=eps)
    out = jax.block_until_ready(out)

    ref = batch_norm_local_ref(x, weight, bias, virtual_bs=virtual_bs, eps=eps)
    np.testing.assert_allclose(np.asarray(out), np.asarray(ref), rtol=1e-5, atol=1e-5)

    print("KERNEL_OK")
</pallas_src>

<mosaic_0001>
module attributes {stable_mosaic.version = 11 : i64} {
  func.func @_bn_local_kernel(%arg0: i32, %arg1: i32, %arg2: memref<1x8x8x128xf32, #tpu.memory_space<vmem>>, %arg3: memref<8x1xf32, #tpu.memory_space<vmem>>, %arg4: memref<8x1xf32, #tpu.memory_space<vmem>>, %arg5: memref<1x8x8x128xf32, #tpu.memory_space<vmem>>) attributes {dimension_semantics = [#tpu.dimension_semantics<parallel>, #tpu.dimension_semantics<parallel>], iteration_bounds = array<i64: 2, 1>, scalar_prefetch = 0 : i64, scratch_operands = 0 : i64, tpu.core_type = #tpu.core_type<tc>, window_params = [{transform_indices = @transform_0, window_bounds = array<i64: 1, 8, 8, 128>}, {transform_indices = @transform_1, window_bounds = array<i64: 8, 1>}, {transform_indices = @transform_2, window_bounds = array<i64: 8, 1>}, {transform_indices = @transform_3, window_bounds = array<i64: 1, 8, 8, 128>}]} {
    %c0 = arith.constant 0 : index
    %c0_0 = arith.constant 0 : index
    %c0_1 = arith.constant 0 : index
    %c0_2 = arith.constant 0 : index
    %0 = vector.load %arg2[%c0, %c0_0, %c0_1, %c0_2] : memref<1x8x8x128xf32, #tpu.memory_space<vmem>>, vector<1x8x8x128xf32>
    %1 = vector.shape_cast %0 : vector<1x8x8x128xf32> to vector<8x8x128xf32>
    %cst = arith.constant dense<0.000000e+00> : vector<8xf32>
    %2 = vector.multi_reduction <add>, %1, %cst [0, 2] : vector<8x8x128xf32> to vector<8xf32>
    %3 = vector.shape_cast %2 : vector<8xf32> to vector<1x8x1xf32>
    %4 = arith.mulf %1, %1 : vector<8x8x128xf32>
    %cst_3 = arith.constant dense<0.000000e+00> : vector<8xf32>
    %5 = vector.multi_reduction <add>, %4, %cst_3 [0, 2] : vector<8x8x128xf32> to vector<8xf32>
    %6 = vector.shape_cast %5 : vector<8xf32> to vector<1x8x1xf32>
    %cst_4 = arith.constant 9.765625E-4 : f32
    %7 = vector.broadcast %cst_4 : f32 to vector<1x8x1xf32>
    %8 = arith.mulf %3, %7 : vector<1x8x1xf32>
    %cst_5 = arith.constant 9.765625E-4 : f32
    %9 = vector.broadcast %cst_5 : f32 to vector<1x8x1xf32>
    %10 = arith.mulf %6, %9 : vector<1x8x1xf32>
    %11 = arith.mulf %8, %8 : vector<1x8x1xf32>
    %12 = arith.subf %10, %11 : vector<1x8x1xf32>
    %cst_6 = arith.constant 0.000000e+00 : f32
    %13 = vector.broadcast %cst_6 : f32 to vector<1x8x1xf32>
    %14 = arith.maximumf %12, %13 : vector<1x8x1xf32>
    %cst_7 = arith.constant 9.99999974E-6 : f32
    %15 = vector.broadcast %cst_7 : f32 to vector<1x8x1xf32>
    %16 = arith.addf %14, %15 : vector<1x8x1xf32>
    %17 = math.rsqrt %16 : vector<1x8x1xf32>
    %c0_8 = arith.constant 0 : index
    %c0_9 = arith.constant 0 : index
    %18 = vector.load %arg3[%c0_8, %c0_9] : memref<8x1xf32, #tpu.memory_space<vmem>>, vector<8x1xf32>
    %19 = vector.shape_cast %18 : vector<8x1xf32> to vector<1x8x1xf32>
    %c0_10 = arith.constant 0 : index
    %c0_11 = arith.constant 0 : index
    %20 = vector.load %arg4[%c0_10, %c0_11] : memref<8x1xf32, #tpu.memory_space<vmem>>, vector<8x1xf32>
    %21 = vector.shape_cast %20 : vector<8x1xf32> to vector<1x8x1xf32>
    %22 = arith.mulf %19, %17 : vector<1x8x1xf32>
    %23 = arith.mulf %8, %22 : vector<1x8x1xf32>
    %24 = arith.subf %21, %23 : vector<1x8x1xf32>
    %25 = vector.broadcast %22 : vector<1x8x1xf32> to vector<8x8x128xf32>
    %26 = arith.mulf %1, %25 : vector<8x8x128xf32>
    %27 = vector.broadcast %24 : vector<1x8x1xf32> to vector<8x8x128xf32>
    %28 = arith.addf %26, %27 : vector<8x8x128xf32>
    %c0_12 = arith.constant 0 : index
    %c0_13 = arith.constant 0 : index
    %c0_14 = arith.constant 0 : index
    %c0_15 = arith.constant 0 : index
    %29 = vector.load %arg5[%c0_12, %c0_13, %c0_14, %c0_15] : memref<1x8x8x128xf32, #tpu.memory_space<vmem>>, vector<1x8x8x128xf32>
    %30 = vector.shape_cast %29 : vector<1x8x8x128xf32> to vector<8x8x128xf32>
    %31 = vector.shape_cast %28 : vector<8x8x128xf32> to vector<1x8x8x128xf32>
    tpu.vector_store %arg5[%c0_12, %c0_13, %c0_14, %c0_15], %31 {strides = array<i32>} : memref<1x8x8x128xf32, #tpu.memory_space<vmem>>, vector<1x8x8x128xf32>,
    return
  }
  func.func @transform_0(%arg0: i32, %arg1: i32) -> (i32, i32, i32, i32) {
    %c0_i32 = arith.constant 0 : i32
    %c0_i32_0 = arith.constant 0 : i32
    %c0_i32_1 = arith.constant 0 : i32
    return %arg0, %c0_i32, %arg1, %c0_i32_0 : i32, i32, i32, i32
  }
  func.func @transform_1(%arg0: i32, %arg1: i32) -> (i32, i32) {
    %c0_i32 = arith.constant 0 : i32
    %c0_i32_0 = arith.constant 0 : i32
    return %arg1, %c0_i32 : i32, i32
  }
  func.func @transform_2(%arg0: i32, %arg1: i32) -> (i32, i32) {
    %c0_i32 = arith.constant 0 : i32
    %c0_i32_0 = arith.constant 0 : i32
    return %arg1, %c0_i32 : i32, i32
  }
  func.func @transform_3(%arg0: i32, %arg1: i32) -> (i32, i32, i32, i32) {
    %c0_i32 = arith.constant 0 : i32
    %c0_i32_0 = arith.constant 0 : i32
    %c0_i32_1 = arith.constant 0 : i32
    return %arg0, %c0_i32, %arg1, %c0_i32_0 : i32, i32, i32, i32
  }
}

</mosaic_0001>

<llo_original>
// kernel: tpu_custom_call.1
$region0: #{tpu_custom_call.1}
  #allocation0 [shape = 'u32[]', space=smem, size = 0x4, offset = 0x4, fixed_abs, tag = 'smem constant byte address 0x4 - core index']
  #allocation1 [shape = 'u32[144,128]{1,0:T(1,128)}', space=vmem, size = 0x12000, scoped, tag = 'internal scratch']
  %s0 = inlined_call_operand.hbm [shape: f32[2,8,8,128], index: 0, kind: input, shape index: {}]
  %s1 = inlined_call_operand.vmem [shape: f32[8,1], index: 1, kind: input, shape index: {}]
  %s2 = inlined_call_operand.vmem [shape: f32[8,1], index: 2, kind: input, shape index: {}]
  %s3 = inlined_call_operand.hbm [shape: f32[2,8,8,128], index: 3, kind: output, shape index: {}]
  %s4 = sld [smem:[#allocation0]]
  $region49: #{tpu_custom_call.1} parent=0
    _
  %s6 = ssub.s32 1, %s4
  %s7 = scalar_select 0, %s6, %s4
  $region1: #{tpu_custom_call.1} parent=0
    #allocation2 [shape = 'u8[65536]{0}', space=vmem, size = 0x10000, scoped, tag = 'input window, operand 0']
    #allocation3 [shape = 's32[2]{0}', space=sflag, size = 0x8, scoped, tag = 'scoped memory for tpu_custom_call.1']
    #allocation4 [shape = 's32[2]{0}', space=sflag, size = 0x8, scoped, tag = 'scoped memory for tpu_custom_call.1']
    #allocation5 [shape = 'u8[65536]{0}', space=vmem, size = 0x10000, scoped, tag = 'output window, operand 0']
    %8 = vsyncpa [#allocation3], 0
    %s9 = scalar_lea.sflag [#allocation3], 1
    %10 = vsyncpa %s9, 0
    %11 = vsyncpa [#allocation4], 0
    %s12 = scalar_lea.sflag [#allocation4], 1
    %13 = vsyncpa %s12, 0
    loop: start=0, step=1, limit=4
    $region2: #{tpu_custom_call.1} parent=1 // loop_pre_header
      _
    $region3: #{tpu_custom_call.1} parent=1 // loop_header
      %s15 = sphi 0, %s19
      %p16 = scmp.ge.s32.totalorder %s15, 4
      %s22 = sphi 0, %s34
      %s23 = sphi 0, %s30
      %s24 = sphi 0, %s22
      %s25 = sphi 0, %s23
      %s26 = sphi 0, %s24
      %s27 = sphi 0, %s25
      %s39 = sphi 0, %s41
      %s42 = sphi 0, %s39
      %s43 = sphi 0, %s42
      %s59 = sphi 0, %s43
      %s65 = sphi 0, %s67
      %s68 = sphi 0, %s65
      %s69 = sphi 0, %s68
      %s85 = sphi 0, %s69
      %s91 = sphi 0, %s93
      %s94 = sphi 0, %s91
      %s95 = sphi 0, %s94
      %s111 = sphi 0, %s95
      %s119 = sphi 0, %s121
      %s122 = sphi 0, %s119
      %s123 = sphi 0, %s122
      %s139 = sphi 0, %s123
    $region4: #{tpu_custom_call.1} parent=1 // loop_header_branch
      %18 = sbr.rel (%p16) target = $region8
    $region5: #{tpu_custom_call.1} parent=1 // loop_body
      %s20 = ssub.s32 %s15, 1
      %s21 = ssub.s32 %s15, 2
      %s28 = sadd.s32 1, %s23
      %p29 = scmp.ge.s32.totalorder %s28, 1
      %s30 = scalar_select %p29, 0, %s28
      %s31 = sadd.s32 1, %s22
      %s32 = scalar_select %p29, %s31, %s22
      %p33 = scmp.ge.s32.totalorder %s32, 2
      %s34 = scalar_select %p33, 0, %s32
      %s35 = ssub.s32 %s22, %s34
      %s36 = ssub.s32 %s23, %s30
      %s37 = sor.u32 %s35, %s36
      %p38 = scmp.eq.s32.totalorder %s37, 0
      %s40 = sadd.s32 %s39, 1
      %s41 = scalar_select %p38, %s39, %s40
      %p44 = pneg %p38
      %p45 = scmp.eq.s32.totalorder %s15, 1
      %p46 = por %p44, %p45
      %p47 = scmp.ne.s32.totalorder %s39, %s42
      %p48 = scmp.eq.s32.totalorder %s15, 0
      %p49 = por %p47, %p48
      %p50 = scmp.ne.s32.totalorder %s39, %s42
      %p51 = scmp.eq.s32.totalorder %s20, 1
      %p52 = por %p50, %p51
      %p53 = scmp.ne.s32.totalorder %s42, %s43
      %p54 = scmp.eq.s32.totalorder %s20, 0
      %p55 = por %p53, %p54
      %p56 = scmp.ne.s32.totalorder %s42, %s43
      %p57 = scmp.eq.s32.totalorder %s21, 1
      %p58 = por %p56, %p57
      %p60 = scmp.ne.s32.totalorder %s43, %s59
      %p61 = scmp.eq.s32.totalorder %s21, 0
      %p62 = por %p60, %p61
      %s63 = ssub.s32 %s23, %s30
      %p64 = scmp.eq.s32.totalorder %s63, 0
      %s66 = sadd.s32 %s65, 1
      %s67 = scalar_select %p64, %s65, %s66
      %p70 = pneg %p64
      %p71 = scmp.eq.s32.totalorder %s15, 1
      %p72 = por %p70, %p71
      %p73 = scmp.ne.s32.totalorder %s65, %s68
      %p74 = scmp.eq.s32.totalorder %s15, 0
      %p75 = por %p73, %p74
      %p76 = scmp.ne.s32.totalorder %s65, %s68
      %p77 = scmp.eq.s32.totalorder %s20, 1
      %p78 = por %p76, %p77
      %p79 = scmp.ne.s32.totalorder %s68, %s69
      %p80 = scmp.eq.s32.totalorder %s20, 0
      %p81 = por %p79, %p80
      %p82 = scmp.ne.s32.totalorder %s68, %s69
      %p83 = scmp.eq.s32.totalorder %s21, 1
      %p84 = por %p82, %p83
      %p86 = scmp.ne.s32.totalorder %s69, %s85
      %p87 = scmp.eq.s32.totalorder %s21, 0
      %p88 = por %p86, %p87
      %s89 = ssub.s32 %s23, %s30
      %p90 = scmp.eq.s32.totalorder %s89, 0
      %s92 = sadd.s32 %s91, 1
      %s93 = scalar_select %p90, %s91, %s92
      %p96 = pneg %p90
      %p97 = scmp.eq.s32.totalorder %s15, 1
      %p98 = por %p96, %p97
      %p99 = scmp.ne.s32.totalorder %s91, %s94
      %p100 = scmp.eq.s32.totalorder %s15, 0
      %p101 = por %p99, %p100
      %p102 = scmp.ne.s32.totalorder %s91, %s94
      %p103 = scmp.eq.s32.totalorder %s20, 1
      %p104 = por %p102, %p103
      %p105 = scmp.ne.s32.totalorder %s94, %s95
      %p106 = scmp.eq.s32.totalorder %s20, 0
      %p107 = por %p105, %p106
      %p108 = scmp.ne.s32.totalorder %s94, %s95
      %p109 = scmp.eq.s32.totalorder %s21, 1
      %p110 = por %p108, %p109
      %p112 = scmp.ne.s32.totalorder %s95, %s111
      %p113 = scmp.eq.s32.totalorder %s21, 0
      %p114 = por %p112, %p113
      %s115 = ssub.s32 %s22, %s34
      %s116 = ssub.s32 %s23, %s30
      %s117 = sor.u32 %s115, %s116
      %p118 = scmp.eq.s32.totalorder %s117, 0
      %s120 = sadd.s32 %s119, 1
      %s121 = scalar_select %p118, %s119, %s120
      %p124 = pneg %p118
      %p125 = scmp.eq.s32.totalorder %s15, 1
      %p126 = por %p124, %p125
      %p127 = scmp.ne.s32.totalorder %s119, %s122
      %p128 = scmp.eq.s32.totalorder %s15, 0
      %p129 = por %p127, %p128
      %p130 = scmp.ne.s32.totalorder %s119, %s122
      %p131 = scmp.eq.s32.totalorder %s20, 1
      %p132 = por %p130, %p131
      %p133 = scmp.ne.s32.totalorder %s122, %s123
      %p134 = scmp.eq.s32.totalorder %s20, 0
      %p135 = por %p133, %p134
      %p136 = scmp.ne.s32.totalorder %s122, %s123
      %p137 = scmp.eq.s32.totalorder %s21, 1
      %p138 = por %p136, %p137
      %p140 = scmp.ne.s32.totalorder %s123, %s139
      %p141 = scmp.eq.s32.totalorder %s21, 0
      %p142 = por %p140, %p141
      %p143 = scmp.le.s32.totalorder 1, %s15
      %p144 = scmp.lt.s32.totalorder %s15, 3
      %p145 = pnand %p143, %p144
      %p146 = pneg %p145
      // Predicated region
      $region9: #{tpu_custom_call.1} parent=5 // pred_check
        _
      $region10: #{tpu_custom_call.1} parent=5 // pred_check_branch
        %148 = sbr.rel (%p145) target = $region12
      $region11: #{tpu_custom_call.1} parent=5 // pred_region
        %s149 = ssub.s32 %s15, 1
        // Predicated region
        $region13: #{tpu_custom_call.1} parent=11 // pred_check
          %p150 = pneg %p81
        $region14: #{tpu_custom_call.1} parent=11 // pred_check_branch
          %152 = sbr.rel (%p150) target = $region16
        $region15: #{tpu_custom_call.1} parent=11 // pred_region
          %p153 = scmp.lt.s32.totalorder %s25, 0
          %s154 = scalar_select %p153, %s25, 0
          %s155 = smul.addr %s154, 8
          %s156 = scalar_lea.vmem %s1, %s155
        $region16: #{tpu_custom_call.1} parent=11 // pred_fallthru
          _
        // Predicated region
        $region17: #{tpu_custom_call.1} parent=11 // pred_check
          %p157 = pneg %p107
        $region18: #{tpu_custom_call.1} parent=11 // pred_check_branch
          %159 = sbr.rel (%p157) target = $region20
        $region19: #{tpu_custom_call.1} parent=11 // pred_region
          %p160 = scmp.lt.s32.totalorder %s25, 0
          %s161 = scalar_select %p160, %s25, 0
          %s162 = smul.addr %s161, 8
          %s163 = scalar_lea.vmem %s2, %s162
        $region20: #{tpu_custom_call.1} parent=11 // pred_fallthru
          _
      $region12: #{tpu_custom_call.1} parent=5 // pred_fallthru
        _
      %p164 = scmp.lt.s32.totalorder %s15, 2
      // Predicated region
      $region21: #{tpu_custom_call.1} parent=5 // pred_check
        %p165 = pneg %p164
      $region22: #{tpu_custom_call.1} parent=5 // pred_check_branch
        %167 = sbr.rel (%p165) target = $region24
      $region23: #{tpu_custom_call.1} parent=5 // pred_region
        // Predicated region
        $region25: #{tpu_custom_call.1} parent=23 // pred_check
          %p168 = pneg %p49
        $region26: #{tpu_custom_call.1} parent=23 // pred_check_branch
          %170 = sbr.rel (%p168) target = $region28
        $region27: #{tpu_custom_call.1} parent=23 // pred_region
          %s171 = sand.u32 %s39, 1
          %s172 = scalar_lea.sflag [#allocation3], %s171
          %s173 = sand.u32 %s39, 1
          %s174 = smul.addr %s173, 64
          %s175 = scalar_lea.vmem [#allocation2], %s174
          %s177 = ssub.s32 1024, 1024
          %178 = vsyncadd %s172, %s177
          %s179 = smul.addr %s22, 8
          %s180 = sadd.s32 %s23, %s179
          %s181 = smul.addr %s180, 128
          %s182 = scalar_lea.hbm %s0, %s181
          %s183 = sshll.u32 %s175, 4
          %s184 = int_to_ptr.vmem [resolvable:$true] %s183
          %189 = dma.hbm_to_vmem [thread:$0]  %s182, 1024, %s184, %s172, 128, 128, 8
        $region28: #{tpu_custom_call.1} parent=23 // pred_fallthru
          _
      $region24: #{tpu_custom_call.1} parent=5 // pred_fallthru
        _
      %p190 = scmp.le.s32.totalorder 1, %s15
      %p191 = scmp.lt.s32.totalorder %s15, 3
      %p192 = pnand %p190, %p191
      %p193 = pneg %p192
      // Predicated region
      $region29: #{tpu_custom_call.1} parent=5 // pred_check
        _
      $region30: #{tpu_custom_call.1} parent=5 // pred_check_branch
        %195 = sbr.rel (%p192) target = $region32
      $region31: #{tpu_custom_call.1} parent=5 // pred_region
        %s196 = ssub.s32 %s15, 1
        %s197 = sand.u32 %s42, 1
        %s198 = scalar_lea.sflag [#allocation3], %s197
        %s199 = sand.u32 %s42, 1
        %s200 = smul.addr %s199, 64
        %s201 = scalar_lea.vmem [#allocation2], %s200
        // Predicated region
        $region33: #{tpu_custom_call.1} parent=31 // pred_check
          %p202 = pneg %p55
        $region34: #{tpu_custom_call.1} parent=31 // pred_check_branch
          %204 = sbr.rel (%p202) target = $region36
        $region35: #{tpu_custom_call.1} parent=31 // pred_region
          %205 = dma.done %s198, 1024
        $region36: #{tpu_custom_call.1} parent=31 // pred_fallthru
          _
        %s206 = sand.u32 %s42, 1
        %s207 = scalar_lea.sflag [#allocation3], %s206
        %s208 = sand.u32 %s42, 1
        %s209 = smul.addr %s208, 64
        %s210 = scalar_lea.vmem [#allocation2], %s209
        %p211 = pneg %p55
        %p212 = pneg %p52
        %p213 = scmp.lt.s32.totalorder %s25, 0
        %s214 = scalar_select %p213, %s25, 0
        %s215 = smul.addr %s214, 8
        %s216 = scalar_lea.vmem %s1, %s215
        %p217 = pneg %p81
        %p218 = pneg %p78
        %p219 = scmp.lt.s32.totalorder %s25, 0
        %s220 = scalar_select %p219, %s25, 0
        %s221 = smul.addr %s220, 8
        %s222 = scalar_lea.vmem %s2, %s221
        %p223 = pneg %p107
        %p224 = pneg %p104
        %p225 = pneg %p135
        %p226 = pneg %p132
        %s227 = sand.u32 %s122, 1
        %s228 = scalar_lea.sflag [#allocation4], %s227
        %s229 = sand.u32 %s122, 1
        %s230 = smul.addr %s229, 64
        %s231 = scalar_lea.vmem [#allocation5], %s230
        %p232 = scmp.lt.s32.totalorder %s25, 0
        %s233 = scalar_select %p232, %s25, 0
        %s234 = smul.addr %s233, 8
        %s235 = scalar_lea.vmem %s1, %s234
        %p236 = scmp.lt.s32.totalorder %s25, 0
        %s237 = scalar_select %p236, %s25, 0
        %s238 = smul.addr %s237, 8
        %s239 = scalar_lea.vmem %s2, %s238
        %v240 = vld [vmem:[%s201] sm:$0xff]
        %v241 = vld [vmem:[%s201 + $0x8] sm:$0xff]
        %v242 = vld [vmem:[%s201 + $0x10] sm:$0xff]
        %v243 = vld [vmem:[%s201 + $0x18] sm:$0xff]
        %v244 = vld [vmem:[%s201 + $0x20] sm:$0xff]
        %v245 = vld [vmem:[%s201 + $0x28] sm:$0xff]
        %v246 = vld [vmem:[%s201 + $0x30] sm:$0xff]
        %v247 = vld [vmem:[%s201 + $0x38] sm:$0xff]
        %v248 = vadd.f32 %v240, %v241
        %v249 = vadd.f32 %v248, %v242
        %v250 = vadd.f32 %v249, %v243
        %v251 = vadd.f32 %v250, %v244
        %v252 = vadd.f32 %v251, %v245
        %v253 = vadd.f32 %v252, %v246
        %v254 = vadd.f32 %v253, %v247
        %255 = vadd.xlane.f32.xlu0 %v254
        %v256 = vpop.xlane.xlu0 %255
        %v257 = vmul.f32 %v240, %v240
        %v258 = vmul.f32 %v241, %v241
        %v259 = vmul.f32 %v242, %v242
        %v260 = vmul.f32 %v243, %v243
        %v261 = vmul.f32 %v244, %v244
        %v262 = vmul.f32 %v245, %v245
        %v263 = vmul.f32 %v246, %v246
        %v264 = vmul.f32 %v247, %v247
        %v265 = vadd.f32 %v257, %v258
        %v266 = vadd.f32 %v265, %v259
        %v267 = vadd.f32 %v266, %v260
        %v268 = vadd.f32 %v267, %v261
        %v269 = vadd.f32 %v268, %v262
        %v270 = vadd.f32 %v269, %v263
        %v271 = vadd.f32 %v270, %v264
        %272 = vadd.xlane.f32.xlu0 %v271
        %v273 = vpop.xlane.xlu0 %272
        %v274 = vmul.f32 %v256, 0.0009765625
        %v275 = vmul.f32 %v273, 0.0009765625
        %v276 = vmul.f32 %v274, %v274
        %v277 = vsub.f32 %v275, %v276
        %v278 = vmax.f32 %v277, 0.0
        %v279 = vadd.f32 %v278, 1e-05
        %v280 = vrsqrt.pop %v279
        %v281 = vld [vmem:[%s235] sm:$0xff]
        %v282 = vld [vmem:[%s239] sm:$0xff]
        %v283 = vmul.f32 %v281, %v280
        %v284 = vmul.f32 %v274, %v283
        %v285 = vsub.f32 %v282, %v284
        %287 = vset.pattern.permute.xlu0 0
        %288 = vperm.xlu0 %287, %v283
        %v289 = vpop.permute.xlu0 %288
        %v291 = vmul.f32 %v240, %v289
        %v292 = vmul.f32 %v241, %v289
        %v293 = vmul.f32 %v242, %v289
        %v294 = vmul.f32 %v243, %v289
        %v295 = vmul.f32 %v244, %v289
        %v296 = vmul.f32 %v245, %v289
        %v297 = vmul.f32 %v246, %v289
        %v298 = vmul.f32 %v247, %v289
        %300 = vset.pattern.permute.xlu0 0
        %301 = vperm.xlu0 %300, %v285
        %v302 = vpop.permute.xlu0 %301
        %v304 = vadd.f32 %v291, %v302
        %v305 = vadd.f32 %v292, %v302
        %v306 = vadd.f32 %v293, %v302
        %v307 = vadd.f32 %v294, %v302
        %v308 = vadd.f32 %v295, %v302
        %v309 = vadd.f32 %v296, %v302
        %v310 = vadd.f32 %v297, %v302
        %v311 = vadd.f32 %v298, %v302
        %312 = vst [vmem:[%s231] sm:$0xff] %v304
        %313 = vst [vmem:[%s231 + $0x8] sm:$0xff] %v305
        %314 = vst [vmem:[%s231 + $0x10] sm:$0xff] %v306
        %315 = vst [vmem:[%s231 + $0x18] sm:$0xff] %v307
        %316 = vst [vmem:[%s231 + $0x20] sm:$0xff] %v308
        %317 = vst [vmem:[%s231 + $0x28] sm:$0xff] %v309
        %318 = vst [vmem:[%s231 + $0x30] sm:$0xff] %v310
        %319 = vst [vmem:[%s231 + $0x38] sm:$0xff] %v311
        %s320 = sand.u32 %s122, 1
        %s321 = scalar_lea.sflag [#allocation4], %s320
        %s322 = sand.u32 %s122, 1
        %s323 = smul.addr %s322, 64
        %s324 = scalar_lea.vmem [#allocation5], %s323
        // Predicated region
        $region37: #{tpu_custom_call.1} parent=31 // pred_check
          %p325 = pneg %p132
        $region38: #{tpu_custom_call.1} parent=31 // pred_check_branch
          %327 = sbr.rel (%p325) target = $region40
        $region39: #{tpu_custom_call.1} parent=31 // pred_region
          %s329 = ssub.s32 1024, 1024
          %330 = vsyncadd %s321, %s329
          %s331 = smul.addr %s24, 8
          %s332 = sadd.s32 %s25, %s331
          %s333 = smul.addr %s332, 128
          %s334 = scalar_lea.hbm %s3, %s333
          %s335 = sshll.u32 %s324, 4
          %s336 = int_to_ptr.vmem [resolvable:$true] %s335
          %341 = dma.vmem_to_hbm [thread:$0]  %s336, 1024, %s334, %s321, 128, 128, 8
        $region40: #{tpu_custom_call.1} parent=31 // pred_fallthru
          _
      $region32: #{tpu_custom_call.1} parent=5 // pred_fallthru
        _
      %p342 = scmp.le.s32.totalorder 2, %s15
      // Predicated region
      $region41: #{tpu_custom_call.1} parent=5 // pred_check
        %p343 = pneg %p342
      $region42: #{tpu_custom_call.1} parent=5 // pred_check_branch
        %345 = sbr.rel (%p343) target = $region44
      $region43: #{tpu_custom_call.1} parent=5 // pred_region
        %s346 = ssub.s32 %s15, 2
        // Predicated region
        $region45: #{tpu_custom_call.1} parent=43 // pred_check
          %p347 = pneg %p138
        $region46: #{tpu_custom_call.1} parent=43 // pred_check_branch
          %349 = sbr.rel (%p347) target = $region48
        $region47: #{tpu_custom_call.1} parent=43 // pred_region
          %s350 = sand.u32 %s123, 1
          %s351 = scalar_lea.sflag [#allocation4], %s350
          %s352 = sand.u32 %s123, 1
          %s353 = smul.addr %s352, 64
          %s354 = scalar_lea.vmem [#allocation5], %s353
          %355 = dma.done %s351, 1024
        $region48: #{tpu_custom_call.1} parent=43 // pred_fallthru
          _
      $region44: #{tpu_custom_call.1} parent=5 // pred_fallthru
        _
    $region6: #{tpu_custom_call.1} parent=1 // loop_footer
      %s19 = sadd.s32 1, %s15
    $region7: #{tpu_custom_call.1} parent=1 // loop_footer_branch
      %14 = sbr.rel target = $region3
    $region8: #{tpu_custom_call.1} parent=1 // loop_exit
      _
    %356 = vsyncpa [#allocation3], 1
    %s357 = scalar_lea.sflag [#allocation3], 1
    %358 = vsyncpa %s357, 1
    %359 = vsyncpa [#allocation4], 1
    %s360 = scalar_lea.sflag [#allocation4], 1
    %361 = vsyncpa %s360, 1

</llo_original>
